<compile_context>
chip_gen: v6e
topology: v6e:2x2x1
jax: 0.10.0
libtpu: 0.0.40
codegen_flags: <defaults>
</compile_context>

<pallas_src>
import numpy as np

import jax
import jax.numpy as jnp
from jax.experimental import pallas as pl
from jax.experimental.pallas import tpu as pltpu

# ----------------------------- hyperparameters ------------------------------
BATCH = 2
IN_CHANNELS = 4
CONV_LAYERS = 4            # conv1 out-ch; conv2 out-ch = 8; conv3 out-ch = 4
CONV_KERNEL = 4            # -> second conv kernel 2, third conv kernel 1
HEIGHT = WIDTH = 16
HIDDEN = 32
VALUE_DIM = 1
FC_IN = CONV_LAYERS * HEIGHT // 8 * WIDTH // 8     # == 16, matches flatten size

IN_FEATS = IN_CHANNELS * HEIGHT * WIDTH            # 1024 (= 8 x 128 lanes)
OUT_LANES = 128                                    # lane-dense activation width
VALUE_COL = HIDDEN                                 # critic value lands in col 32

# Row offsets of each layer's weight inside the packed (W_ROWS, 128) slab.
W1_OFF = 0
W2_OFF = W1_OFF + IN_FEATS                         # 1024
W3_OFF = W2_OFF + OUT_LANES                        # 1152
W4_OFF = W3_OFF + OUT_LANES                        # 1280
W5_OFF = W4_OFF + OUT_LANES                        # 1408
W_ROWS = W5_OFF + OUT_LANES                        # 1536
BIAS_ROWS = 8                                      # sublane-padded bias slab

ROW_TILE = 256                                     # batch rows per grid step


# ----------------------------------------------------------------------------
# Fused kernel: 5 chained matmuls, all activations stay in VMEM/vregs.
# ----------------------------------------------------------------------------
def _cnn_base_fused_kernel(x_ref, w_ref, b_ref, out_ref):
    # conv1 (k=4, s=4) with im2col folded into W1
    h = jnp.dot(x_ref[...], w_ref[W1_OFF:W1_OFF + IN_FEATS, :],
                preferred_element_type=jnp.float32) + b_ref[0:1, :]
    h = jnp.maximum(h, 0.0)
    # conv2 (k=2, s=2)
    h = jnp.dot(h, w_ref[W2_OFF:W2_OFF + OUT_LANES, :],
                preferred_element_type=jnp.float32) + b_ref[1:2, :]
    h = jnp.maximum(h, 0.0)
    # conv3 (k=1, s=1), output columns already in PyTorch NCHW-flatten order
    h = jnp.dot(h, w_ref[W3_OFF:W3_OFF + OUT_LANES, :],
                preferred_element_type=jnp.float32) + b_ref[2:3, :]
    h = jnp.maximum(h, 0.0)
    # fc -> features
    h = jnp.dot(h, w_ref[W4_OFF:W4_OFF + OUT_LANES, :],
                preferred_element_type=jnp.float32) + b_ref[3:4, :]
    feats = jnp.maximum(h, 0.0)
    # critic head; identity diagonal in W5 carries feats through for free.
    out_ref[...] = (jnp.dot(feats, w_ref[W5_OFF:W5_OFF + OUT_LANES, :],
                            preferred_element_type=jnp.float32)
                    + b_ref[4:5, :]).astype(out_ref.dtype)


# ------------------------------- parameters ---------------------------------
def _orthogonal(key, out_dim, in_dim, gain):
    # PyTorch nn.init.orthogonal_ on an (out, in)-shaped weight; stored
    # transposed as (in, out) because everything computes x @ w.
    w = jax.nn.initializers.orthogonal(scale=gain)(key, (out_dim, in_dim),
                                                   jnp.float32)
    return jnp.transpose(w)


def init_params(key):
    """Parameters in PyTorch-equivalent layout (used by the reference)."""
    relu_gain = jnp.sqrt(2.0)            # nn.init.calculate_gain('relu')
    ks = jax.random.split(key, 5)
    p = {}
    # conv1: Conv2d(4, 4, k=4, s=4) -> im2col weight (Cin*4*4, Cout)
    p["w1"] = _orthogonal(ks[0], CONV_LAYERS, IN_CHANNELS * 4 * 4, relu_gain)
    p["b1"] = jnp.zeros((1, CONV_LAYERS), jnp.float32)
    # conv2: Conv2d(4, 8, k=2, s=2)
    p["w2"] = _orthogonal(ks[1], CONV_LAYERS * 2, CONV_LAYERS * 2 * 2, relu_gain)
    p["b2"] = jnp.zeros((1, CONV_LAYERS * 2), jnp.float32)
    # conv3: Conv2d(8, 4, k=1, s=1)
    p["w3"] = _orthogonal(ks[2], CONV_LAYERS, CONV_LAYERS * 2, relu_gain)
    p["b3"] = jnp.zeros((1, CONV_LAYERS), jnp.float32)
    # fc: Linear(16, hidden)
    p["w4"] = _orthogonal(ks[3], HIDDEN, FC_IN, relu_gain)
    p["b4"] = jnp.zeros((1, HIDDEN), jnp.float32)
    # critic_linear: Linear(hidden, value), gain 1
    p["w5"] = _orthogonal(ks[4], VALUE_DIM, HIDDEN, 1.0)
    p["b5"] = jnp.zeros((1, VALUE_DIM), jnp.float32)
    return p


def prepare_kernel_params(p):
    """One-time host-side repack: fold im2col / conv taps / NCHW flatten into
    dense lane-padded weight matrices and pack them into two slabs."""
    C, H, W = IN_CHANNELS, HEIGHT, WIDTH
    C1, C2, C3 = CONV_LAYERS, CONV_LAYERS * 2, CONV_LAYERS
    K1, K2 = CONV_KERNEL, CONV_KERNEL // 2            # 4, 2
    H1 = W1o = (H - K1) // K1 + 1                     # 4
    H2 = W2o = (H1 - K2) // K2 + 1                    # 2

    w1 = np.asarray(p["w1"]).reshape(C, K1, K1, C1)   # (cin, dy, dx, c1)
    b1 = np.asarray(p["b1"]).reshape(C1)
    w2 = np.asarray(p["w2"]).reshape(C1, K2, K2, C2)  # (c1, ky, kx, c2)
    b2 = np.asarray(p["b2"]).reshape(C2)
    w3 = np.asarray(p["w3"])                          # (c2, c3)
    b3 = np.asarray(p["b3"]).reshape(C3)
    w4 = np.asarray(p["w4"])                          # (16, HIDDEN)
    b4 = np.asarray(p["b4"]).reshape(HIDDEN)
    w5 = np.asarray(p["w5"])                          # (HIDDEN, VALUE_DIM)
    b5 = np.asarray(p["b5"]).reshape(VALUE_DIM)

    # --- conv1: (B, C*H*W) @ W1P -> (B, 128); cols = c1*(H1*W1o)+y1*W1o+x1 ---
    W1P = np.zeros((IN_FEATS, OUT_LANES), np.float32)
    B1P = np.zeros(OUT_LANES, np.float32)
    for c1 in range(C1):
        for y1 in range(H1):
            for x1 in range(W1o):
                col = c1 * (H1 * W1o) + y1 * W1o + x1
                B1P[col] = b1[c1]
                for cin in range(C):
                    for dy in range(K1):
                        for dx in range(K1):
                            row = cin * H * W + (y1 * K1 + dy) * W + (x1 * K1 + dx)
                            W1P[row, col] = w1[cin, dy, dx, c1]

    # --- conv2: cols = c2*(H2*W2o)+y2*W2o+x2 ---
    W2P = np.zeros((OUT_LANES, OUT_LANES), np.float32)
    B2P = np.zeros(OUT_LANES, np.float32)
    for c2 in range(C2):
        for y2 in range(H2):
            for x2 in range(W2o):
                col = c2 * (H2 * W2o) + y2 * W2o + x2
                B2P[col] = b2[c2]
                for c1 in range(C1):
                    for ky in range(K2):
                        for kx in range(K2):
                            row = c1 * (H1 * W1o) + (y2 * K2 + ky) * W1o + (x2 * K2 + kx)
                            W2P[row, col] = w2[c1, ky, kx, c2]

    # --- conv3 (1x1): cols already in PyTorch NCHW-flatten order ---
    W3P = np.zeros((OUT_LANES, OUT_LANES), np.float32)
    B3P = np.zeros(OUT_LANES, np.float32)
    for c3 in range(C3):
        for y2 in range(H2):
            for x2 in range(W2o):
                col = c3 * (H2 * W2o) + y2 * W2o + x2
                B3P[col] = b3[c3]
                for c2 in range(C2):
                    row = c2 * (H2 * W2o) + y2 * W2o + x2
                    W3P[row, col] = w3[c2, c3]

    # --- fc ---
    W4P = np.zeros((OUT_LANES, OUT_LANES), np.float32)
    W4P[:FC_IN, :HIDDEN] = w4
    B4P = np.zeros(OUT_LANES, np.float32)
    B4P[:HIDDEN] = b4

    # --- critic head + identity residual carrying feats through ---
    W5P = np.zeros((OUT_LANES, OUT_LANES), np.float32)
    W5P[np.arange(HIDDEN), np.arange(HIDDEN)] = 1.0
    W5P[:HIDDEN, VALUE_COL:VALUE_COL + VALUE_DIM] = w5
    B5P = np.zeros(OUT_LANES, np.float32)
    B5P[VALUE_COL:VALUE_COL + VALUE_DIM] = b5

    wslab = np.concatenate([W1P, W2P, W3P, W4P, W5P], axis=0)  # (1536, 128)
    bslab = np.zeros((BIAS_ROWS, OUT_LANES), np.float32)       # (8, 128)
    bslab[0], bslab[1], bslab[2], bslab[3], bslab[4] = B1P, B2P, B3P, B4P, B5P
    return jnp.asarray(wslab), jnp.asarray(bslab)


# ------------------------------- forward pass -------------------------------
@jax.jit
def cnn_base_forward(x, wslab, bslab):
    """x: (B, C, H, W) float32 NCHW.  Returns (value, features)."""
    B, C, H, W = x.shape
    x_flat = x.reshape(B, C * H * W)            # free bitcast of contiguous NCHW

    rt = ROW_TILE if B >= ROW_TILE else B       # row tile (batch rows per step)
    Bp = ((B + rt - 1) // rt) * rt
    if Bp != B:
        x_flat = jnp.pad(x_flat, ((0, Bp - B), (0, 0)))

    slab = pl.pallas_call(
        _cnn_base_fused_kernel,
        out_shape=jax.ShapeDtypeStruct((Bp, OUT_LANES), jnp.float32),
        grid=(Bp // rt,),
        in_specs=[
            pl.BlockSpec((rt, IN_FEATS), lambda i: (i, 0)),           # activations
            pl.BlockSpec((W_ROWS, OUT_LANES), lambda i: (0, 0)),      # weight slab
            pl.BlockSpec((BIAS_ROWS, OUT_LANES), lambda i: (0, 0)),   # bias slab
        ],
        out_specs=pl.BlockSpec((rt, OUT_LANES), lambda i: (i, 0)),
        compiler_params=pltpu.CompilerParams(
            dimension_semantics=("parallel",)),
    )(x_flat, wslab, bslab)

    feats = slab[:B, :HIDDEN]                                  # (B, 32)
    value = slab[:B, VALUE_COL:VALUE_COL + VALUE_DIM]          # (B, 1)
    return value, feats


# ------------------------- pure-JAX reference (check) ------------------------
def reference_forward(x, params):
    hp = jax.lax.Precision.HIGHEST

    def conv(h, w2d, b, cout, cin, k, stride):
        wc = jnp.transpose(w2d).reshape(cout, cin, k, k)          # OIHW
        y = jax.lax.conv_general_dilated(
            h, wc, (stride, stride), "VALID",
            dimension_numbers=("NCHW", "OIHW", "NCHW"), precision=hp)
        return jax.nn.relu(y + b.reshape(1, -1, 1, 1))

    h = conv(x, params["w1"], params["b1"], CONV_LAYERS, IN_CHANNELS, 4, 4)
    h = conv(h, params["w2"], params["b2"], CONV_LAYERS * 2, CONV_LAYERS, 2, 2)
    h = conv(h, params["w3"], params["b3"], CONV_LAYERS, CONV_LAYERS * 2, 1, 1)
    flat = h.reshape(h.shape[0], -1)
    feats = jax.nn.relu(jnp.dot(flat, params["w4"], precision=hp) + params["b4"])
    value = jnp.dot(feats, params["w5"], precision=hp) + params["b5"]
    return value, feats


# ----------------------------------- main ------------------------------------
if __name__ == "__main__":
    key = jax.random.PRNGKey(0)
    kx, kparam = jax.random.split(key)
    x = jax.random.normal(kx, (BATCH, IN_CHANNELS, HEIGHT, WIDTH), jnp.float32)
    params = init_params(kparam)
    wslab, bslab = prepare_kernel_params(params)     # one-time repack

    value, feats = cnn_base_forward(x, wslab, bslab)
    value = jax.block_until_ready(value)
    feats = jax.block_until_ready(feats)

    assert value.shape == (BATCH, VALUE_DIM) and value.dtype == jnp.float32
    assert feats.shape == (BATCH, HIDDEN) and feats.dtype == jnp.float32

    v_ref, f_ref = reference_forward(x, params)
    # Tolerance tightened (2e-2 -> 1e-4): both paths are f32 matmul chains.
    assert jnp.allclose(value, v_ref, rtol=1e-4, atol=1e-4)
    assert jnp.allclose(feats, f_ref, rtol=1e-4, atol=1e-4)

    print("KERNEL_OK")
</pallas_src>

<mosaic_0001>
module attributes {stable_mosaic.version = 11 : i64} {
  func.func @_cnn_base_fused_kernel(%arg0: i32, %arg1: memref<2x1024xf32, #tpu.memory_space<vmem>>, %arg2: memref<1536x128xf32, #tpu.memory_space<vmem>>, %arg3: memref<8x128xf32, #tpu.memory_space<vmem>>, %arg4: memref<2x128xf32, #tpu.memory_space<vmem>>) attributes {dimension_semantics = [#tpu.dimension_semantics<parallel>], iteration_bounds = array<i64: 1>, scalar_prefetch = 0 : i64, scratch_operands = 0 : i64, tpu.core_type = #tpu.core_type<tc>, window_params = [{transform_indices = @transform_0, window_bounds = array<i64: 2, 1024>}, {pipeline_mode = #tpu.pipeline_mode<synchronous>, transform_indices = @transform_1, window_bounds = array<i64: 1536, 128>}, {pipeline_mode = #tpu.pipeline_mode<synchronous>, transform_indices = @transform_2, window_bounds = array<i64: 8, 128>}, {transform_indices = @transform_3, window_bounds = array<i64: 2, 128>}]} {
    %c0 = arith.constant 0 : index
    %c0_0 = arith.constant 0 : index
    %0 = vector.load %arg1[%c0, %c0_0] : memref<2x1024xf32, #tpu.memory_space<vmem>>, vector<2x1024xf32>
    %c0_1 = arith.constant 0 : index
    %c0_2 = arith.constant 0 : index
    %1 = vector.load %arg2[%c0_1, %c0_2] : memref<1536x128xf32, #tpu.memory_space<vmem>>, vector<1024x128xf32>
    %cst = arith.constant dense<0.000000e+00> : vector<2x128xf32>
    %2 = tpu.matmul %0, %1, %cst {dimension_numbers = #tpu.dot_dimension_numbers<[1], [0], [0], [1], [0, 0, 1, 1], [], []>} : vector<2x1024xf32>, vector<1024x128xf32>, vector<2x128xf32> -> vector<2x128xf32>
    %c0_3 = arith.constant 0 : index
    %c0_4 = arith.constant 0 : index
    %3 = vector.load %arg3[%c0_3, %c0_4] : memref<8x128xf32, #tpu.memory_space<vmem>>, vector<1x128xf32>
    %4 = vector.broadcast %3 : vector<1x128xf32> to vector<2x128xf32>
    %5 = arith.addf %2, %4 : vector<2x128xf32>
    %cst_5 = arith.constant 0.000000e+00 : f32
    %6 = vector.broadcast %cst_5 : f32 to vector<2x128xf32>
    %7 = arith.maximumf %5, %6 : vector<2x128xf32>
    %c1024 = arith.constant 1024 : index
    %c0_6 = arith.constant 0 : index
    %8 = vector.load %arg2[%c1024, %c0_6] : memref<1536x128xf32, #tpu.memory_space<vmem>>, vector<128x128xf32>
    %cst_7 = arith.constant dense<0.000000e+00> : vector<2x128xf32>
    %9 = tpu.matmul %7, %8, %cst_7 {dimension_numbers = #tpu.dot_dimension_numbers<[1], [0], [0], [1], [0, 0, 1, 1], [], []>} : vector<2x128xf32>, vector<128x128xf32>, vector<2x128xf32> -> vector<2x128xf32>
    %c1 = arith.constant 1 : index
    %c0_8 = arith.constant 0 : index
    %10 = vector.load %arg3[%c1, %c0_8] : memref<8x128xf32, #tpu.memory_space<vmem>>, vector<1x128xf32>
    %11 = vector.broadcast %10 : vector<1x128xf32> to vector<2x128xf32>
    %12 = arith.addf %9, %11 : vector<2x128xf32>
    %cst_9 = arith.constant 0.000000e+00 : f32
    %13 = vector.broadcast %cst_9 : f32 to vector<2x128xf32>
    %14 = arith.maximumf %12, %13 : vector<2x128xf32>
    %c1152 = arith.constant 1152 : index
    %c0_10 = arith.constant 0 : index
    %15 = vector.load %arg2[%c1152, %c0_10] : memref<1536x128xf32, #tpu.memory_space<vmem>>, vector<128x128xf32>
    %cst_11 = arith.constant dense<0.000000e+00> : vector<2x128xf32>
    %16 = tpu.matmul %14, %15, %cst_11 {dimension_numbers = #tpu.dot_dimension_numbers<[1], [0], [0], [1], [0, 0, 1, 1], [], []>} : vector<2x128xf32>, vector<128x128xf32>, vector<2x128xf32> -> vector<2x128xf32>
    %c2 = arith.constant 2 : index
    %c0_12 = arith.constant 0 : index
    %17 = vector.load %arg3[%c2, %c0_12] : memref<8x128xf32, #tpu.memory_space<vmem>>, vector<1x128xf32>
    %18 = vector.broadcast %17 : vector<1x128xf32> to vector<2x128xf32>
    %19 = arith.addf %16, %18 : vector<2x128xf32>
    %cst_13 = arith.constant 0.000000e+00 : f32
    %20 = vector.broadcast %cst_13 : f32 to vector<2x128xf32>
    %21 = arith.maximumf %19, %20 : vector<2x128xf32>
    %c1280 = arith.constant 1280 : index
    %c0_14 = arith.constant 0 : index
    %22 = vector.load %arg2[%c1280, %c0_14] : memref<1536x128xf32, #tpu.memory_space<vmem>>, vector<128x128xf32>
    %cst_15 = arith.constant dense<0.000000e+00> : vector<2x128xf32>
    %23 = tpu.matmul %21, %22, %cst_15 {dimension_numbers = #tpu.dot_dimension_numbers<[1], [0], [0], [1], [0, 0, 1, 1], [], []>} : vector<2x128xf32>, vector<128x128xf32>, vector<2x128xf32> -> vector<2x128xf32>
    %c3 = arith.constant 3 : index
    %c0_16 = arith.constant 0 : index
    %24 = vector.load %arg3[%c3, %c0_16] : memref<8x128xf32, #tpu.memory_space<vmem>>, vector<1x128xf32>
    %25 = vector.broadcast %24 : vector<1x128xf32> to vector<2x128xf32>
    %26 = arith.addf %23, %25 : vector<2x128xf32>
    %cst_17 = arith.constant 0.000000e+00 : f32
    %27 = vector.broadcast %cst_17 : f32 to vector<2x128xf32>
    %28 = arith.maximumf %26, %27 : vector<2x128xf32>
    %c1408 = arith.constant 1408 : index
    %c0_18 = arith.constant 0 : index
    %29 = vector.load %arg2[%c1408, %c0_18] : memref<1536x128xf32, #tpu.memory_space<vmem>>, vector<128x128xf32>
    %cst_19 = arith.constant dense<0.000000e+00> : vector<2x128xf32>
    %30 = tpu.matmul %28, %29, %cst_19 {dimension_numbers = #tpu.dot_dimension_numbers<[1], [0], [0], [1], [0, 0, 1, 1], [], []>} : vector<2x128xf32>, vector<128x128xf32>, vector<2x128xf32> -> vector<2x128xf32>
    %c4 = arith.constant 4 : index
    %c0_20 = arith.constant 0 : index
    %31 = vector.load %arg3[%c4, %c0_20] : memref<8x128xf32, #tpu.memory_space<vmem>>, vector<1x128xf32>
    %32 = vector.broadcast %31 : vector<1x128xf32> to vector<2x128xf32>
    %33 = arith.addf %30, %32 : vector<2x128xf32>
    %c0_21 = arith.constant 0 : index
    %c0_22 = arith.constant 0 : index
    %34 = vector.load %arg4[%c0_21, %c0_22] : memref<2x128xf32, #tpu.memory_space<vmem>>, vector<2x128xf32>
    tpu.vector_store %arg4[%c0_21, %c0_22], %33 {strides = array<i32>} : memref<2x128xf32, #tpu.memory_space<vmem>>, vector<2x128xf32>,
    return
  }
  func.func @transform_0(%arg0: i32) -> (i32, i32) {
    %c0_i32 = arith.constant 0 : i32
    %c0_i32_0 = arith.constant 0 : i32
    return %arg0, %c0_i32 : i32, i32
  }
  func.func @transform_1(%arg0: i32) -> (i32, i32) {
    %c0_i32 = arith.constant 0 : i32
    %c0_i32_0 = arith.constant 0 : i32
    %c0_i32_1 = arith.constant 0 : i32
    return %c0_i32, %c0_i32_0 : i32, i32
  }
  func.func @transform_2(%arg0: i32) -> (i32, i32) {
    %c0_i32 = arith.constant 0 : i32
    %c0_i32_0 = arith.constant 0 : i32
    %c0_i32_1 = arith.constant 0 : i32
    return %c0_i32, %c0_i32_0 : i32, i32
  }
  func.func @transform_3(%arg0: i32) -> (i32, i32) {
    %c0_i32 = arith.constant 0 : i32
    %c0_i32_0 = arith.constant 0 : i32
    return %arg0, %c0_i32 : i32, i32
  }
}

</mosaic_0001>

<llo_original>
// kernel: cnn_base_forward.1
$region0: #{cnn_base_forward.1}
  #allocation0 [shape = 'u32[]', space=smem, size = 0x4, offset = 0x4, fixed_abs, tag = 'smem constant byte address 0x4 - core index']
  #allocation1 [shape = 'u32[144,128]{1,0:T(1,128)}', space=vmem, size = 0x12000, scoped, tag = 'internal scratch']
  %s0 = inlined_call_operand.vmem [shape: f32[2,1024], index: 0, kind: input, shape index: {}]
  %s1 = inlined_call_operand.hbm [shape: f32[1536,128], index: 1, kind: input, shape index: {}]
  %s2 = inlined_call_operand.vmem [shape: f32[8,128], index: 2, kind: input, shape index: {}]
  %s3 = inlined_call_operand.vmem [shape: f32[2,128], index: 3, kind: output, shape index: {}]
  %s4 = sld [smem:[#allocation0]]
  $region26: #{cnn_base_forward.1} parent=0
    _
  %s6 = ssub.s32 1, %s4
  %s7 = scalar_select 0, %s6, %s4
  $region1: #{cnn_base_forward.1} parent=0
    #allocation2 [shape = 'u8[786432]{0}', space=vmem, size = 0xc0000, scoped, tag = 'input window, operand 1, single buffered']
    #allocation3 [shape = 's32[1]{0}', space=sflag, size = 0x4, scoped, tag = 'scoped memory for cnn_base_forward.1']
    %8 = vsyncpa [#allocation3], 0
    // Predicated region
    $region2: #{cnn_base_forward.1} parent=1 // pred_check
      _
    $region3: #{cnn_base_forward.1} parent=1 // pred_check_branch
      %10 = sbr.rel (0) target = $region5
    $region4: #{cnn_base_forward.1} parent=1 // pred_region
      _
    $region5: #{cnn_base_forward.1} parent=1 // pred_fallthru
      _
    // Predicated region
    $region6: #{cnn_base_forward.1} parent=1 // pred_check
      _
    $region7: #{cnn_base_forward.1} parent=1 // pred_check_branch
      %12 = sbr.rel (0) target = $region9
    $region8: #{cnn_base_forward.1} parent=1 // pred_region
      %s14 = ssub.s32 24576, 24576
      %15 = vsyncadd [#allocation3], %s14
      %s16 = sshll.u32 [#allocation2], 4
      %s17 = int_to_ptr.vmem [resolvable:$true] %s16
      %22 = dma.hbm_to_vmem [thread:$0]  %s1, 24576, %s17, [#allocation3], 128, 128, 8
    $region9: #{cnn_base_forward.1} parent=1 // pred_fallthru
      _
    // Predicated region
    $region10: #{cnn_base_forward.1} parent=1 // pred_check
      _
    $region11: #{cnn_base_forward.1} parent=1 // pred_check_branch
      %24 = sbr.rel (0) target = $region13
    $region12: #{cnn_base_forward.1} parent=1 // pred_region
      _
    $region13: #{cnn_base_forward.1} parent=1 // pred_fallthru
      _
    // Predicated region
    $region14: #{cnn_base_forward.1} parent=1 // pred_check
      _
    $region15: #{cnn_base_forward.1} parent=1 // pred_check_branch
      %26 = sbr.rel (0) target = $region17
    $region16: #{cnn_base_forward.1} parent=1 // pred_region
      %27 = dma.done [#allocation3], 24576
    $region17: #{cnn_base_forward.1} parent=1 // pred_fallthru
      _
    %v28 = vld [vmem:[%s0] sm:$0xff]
    %v29 = vld [vmem:[%s0 + $0x8] sm:$0xff]
    %v30 = vld [vmem:[#allocation2] sm:$0xff]
    %v31 = vld [vmem:[#allocation2 + $0x8] sm:$0xff]
    %v32 = vld [vmem:[#allocation2 + $0x10] sm:$0xff]
    %v33 = vld [vmem:[#allocation2 + $0x18] sm:$0xff]
    %v34 = vld [vmem:[#allocation2 + $0x20] sm:$0xff]
    %v35 = vld [vmem:[#allocation2 + $0x28] sm:$0xff]
    %v36 = vld [vmem:[#allocation2 + $0x30] sm:$0xff]
    %v37 = vld [vmem:[#allocation2 + $0x38] sm:$0xff]
    %v38 = vld [vmem:[#allocation2 + $0x40] sm:$0xff]
    %v39 = vld [vmem:[#allocation2 + $0x48] sm:$0xff]
    %v40 = vld [vmem:[#allocation2 + $0x50] sm:$0xff]
    %v41 = vld [vmem:[#allocation2 + $0x58] sm:$0xff]
    %v42 = vld [vmem:[#allocation2 + $0x60] sm:$0xff]
    %v43 = vld [vmem:[#allocation2 + $0x68] sm:$0xff]
    %v44 = vld [vmem:[#allocation2 + $0x70] sm:$0xff]
    %v45 = vld [vmem:[#allocation2 + $0x78] sm:$0xff]
    %v46 = vld [vmem:[#allocation2 + $0x80] sm:$0xff]
    %v47 = vld [vmem:[#allocation2 + $0x88] sm:$0xff]
    %v48 = vld [vmem:[#allocation2 + $0x90] sm:$0xff]
    %v49 = vld [vmem:[#allocation2 + $0x98] sm:$0xff]
    %v50 = vld [vmem:[#allocation2 + $0xa0] sm:$0xff]
    %v51 = vld [vmem:[#allocation2 + $0xa8] sm:$0xff]
    %v52 = vld [vmem:[#allocation2 + $0xb0] sm:$0xff]
    %v53 = vld [vmem:[#allocation2 + $0xb8] sm:$0xff]
    %v54 = vld [vmem:[#allocation2 + $0xc0] sm:$0xff]
    %v55 = vld [vmem:[#allocation2 + $0xc8] sm:$0xff]
    %v56 = vld [vmem:[#allocation2 + $0xd0] sm:$0xff]
    %v57 = vld [vmem:[#allocation2 + $0xd8] sm:$0xff]
    %v58 = vld [vmem:[#allocation2 + $0xe0] sm:$0xff]
    %v59 = vld [vmem:[#allocation2 + $0xe8] sm:$0xff]
    %v60 = vld [vmem:[#allocation2 + $0xf0] sm:$0xff]
    %v61 = vld [vmem:[#allocation2 + $0xf8] sm:$0xff]
    %v62 = vld [vmem:[#allocation2 + $0x100] sm:$0xff]
    %v63 = vld [vmem:[#allocation2 + $0x108] sm:$0xff]
    %v64 = vld [vmem:[#allocation2 + $0x110] sm:$0xff]
    %v65 = vld [vmem:[#allocation2 + $0x118] sm:$0xff]
    %v66 = vld [vmem:[#allocation2 + $0x120] sm:$0xff]
    %v67 = vld [vmem:[#allocation2 + $0x128] sm:$0xff]
    %v68 = vld [vmem:[#allocation2 + $0x130] sm:$0xff]
    %v69 = vld [vmem:[#allocation2 + $0x138] sm:$0xff]
    %v70 = vld [vmem:[#allocation2 + $0x140] sm:$0xff]
    %v71 = vld [vmem:[#allocation2 + $0x148] sm:$0xff]
    %v72 = vld [vmem:[#allocation2 + $0x150] sm:$0xff]
    %v73 = vld [vmem:[#allocation2 + $0x158] sm:$0xff]
    %v74 = vld [vmem:[#allocation2 + $0x160] sm:$0xff]
    %v75 = vld [vmem:[#allocation2 + $0x168] sm:$0xff]
    %v76 = vld [vmem:[#allocation2 + $0x170] sm:$0xff]
    %v77 = vld [vmem:[#allocation2 + $0x178] sm:$0xff]
    %v78 = vld [vmem:[#allocation2 + $0x180] sm:$0xff]
    %v79 = vld [vmem:[#allocation2 + $0x188] sm:$0xff]
    %v80 = vld [vmem:[#allocation2 + $0x190] sm:$0xff]
    %v81 = vld [vmem:[#allocation2 + $0x198] sm:$0xff]
    %v82 = vld [vmem:[#allocation2 + $0x1a0] sm:$0xff]
    %v83 = vld [vmem:[#allocation2 + $0x1a8] sm:$0xff]
    %v84 = vld [vmem:[#allocation2 + $0x1b0] sm:$0xff]
    %v85 = vld [vmem:[#allocation2 + $0x1b8] sm:$0xff]
    %v86 = vld [vmem:[#allocation2 + $0x1c0] sm:$0xff]
    %v87 = vld [vmem:[#allocation2 + $0x1c8] sm:$0xff]
    %v88 = vld [vmem:[#allocation2 + $0x1d0] sm:$0xff]
    %v89 = vld [vmem:[#allocation2 + $0x1d8] sm:$0xff]
    %v90 = vld [vmem:[#allocation2 + $0x1e0] sm:$0xff]
    %v91 = vld [vmem:[#allocation2 + $0x1e8] sm:$0xff]
    %v92 = vld [vmem:[#allocation2 + $0x1f0] sm:$0xff]
    %v93 = vld [vmem:[#allocation2 + $0x1f8] sm:$0xff]
    %v94 = vld [vmem:[#allocation2 + $0x200] sm:$0xff]
    %v95 = vld [vmem:[#allocation2 + $0x208] sm:$0xff]
    %v96 = vld [vmem:[#allocation2 + $0x210] sm:$0xff]
    %v97 = vld [vmem:[#allocation2 + $0x218] sm:$0xff]
    %v98 = vld [vmem:[#allocation2 + $0x220] sm:$0xff]
    %v99 = vld [vmem:[#allocation2 + $0x228] sm:$0xff]
    %v100 = vld [vmem:[#allocation2 + $0x230] sm:$0xff]
    %v101 = vld [vmem:[#allocation2 + $0x238] sm:$0xff]
    %v102 = vld [vmem:[#allocation2 + $0x240] sm:$0xff]
    %v103 = vld [vmem:[#allocation2 + $0x248] sm:$0xff]
    %v104 = vld [vmem:[#allocation2 + $0x250] sm:$0xff]
    %v105 = vld [vmem:[#allocation2 + $0x258] sm:$0xff]
    %v106 = vld [vmem:[#allocation2 + $0x260] sm:$0xff]
    %v107 = vld [vmem:[#allocation2 + $0x268] sm:$0xff]
    %v108 = vld [vmem:[#allocation2 + $0x270] sm:$0xff]
    %v109 = vld [vmem:[#allocation2 + $0x278] sm:$0xff]
    %v110 = vld [vmem:[#allocation2 + $0x280] sm:$0xff]
    %v111 = vld [vmem:[#allocation2 + $0x288] sm:$0xff]
    %v112 = vld [vmem:[#allocation2 + $0x290] sm:$0xff]
    %v113 = vld [vmem:[#allocation2 + $0x298] sm:$0xff]
    %v114 = vld [vmem:[#allocation2 + $0x2a0] sm:$0xff]
    %v115 = vld [vmem:[#allocation2 + $0x2a8] sm:$0xff]
    %v116 = vld [vmem:[#allocation2 + $0x2b0] sm:$0xff]
    %v117 = vld [vmem:[#allocation2 + $0x2b8] sm:$0xff]
    %v118 = vld [vmem:[#allocation2 + $0x2c0] sm:$0xff]
    %v119 = vld [vmem:[#allocation2 + $0x2c8] sm:$0xff]
    %v120 = vld [vmem:[#allocation2 + $0x2d0] sm:$0xff]
    %v121 = vld [vmem:[#allocation2 + $0x2d8] sm:$0xff]
    %v122 = vld [vmem:[#allocation2 + $0x2e0] sm:$0xff]
    %v123 = vld [vmem:[#allocation2 + $0x2e8] sm:$0xff]
    %v124 = vld [vmem:[#allocation2 + $0x2f0] sm:$0xff]
    %v125 = vld [vmem:[#allocation2 + $0x2f8] sm:$0xff]
    %v126 = vld [vmem:[#allocation2 + $0x300] sm:$0xff]
    %v127 = vld [vmem:[#allocation2 + $0x308] sm:$0xff]
    %v128 = vld [vmem:[#allocation2 + $0x310] sm:$0xff]
    %v129 = vld [vmem:[#allocation2 + $0x318] sm:$0xff]
    %v130 = vld [vmem:[#allocation2 + $0x320] sm:$0xff]
    %v131 = vld [vmem:[#allocation2 + $0x328] sm:$0xff]
    %v132 = vld [vmem:[#allocation2 + $0x330] sm:$0xff]
    %v133 = vld [vmem:[#allocation2 + $0x338] sm:$0xff]
    %v134 = vld [vmem:[#allocation2 + $0x340] sm:$0xff]
    %v135 = vld [vmem:[#allocation2 + $0x348] sm:$0xff]
    %v136 = vld [vmem:[#allocation2 + $0x350] sm:$0xff]
    %v137 = vld [vmem:[#allocation2 + $0x358] sm:$0xff]
    %v138 = vld [vmem:[#allocation2 + $0x360] sm:$0xff]
    %v139 = vld [vmem:[#allocation2 + $0x368] sm:$0xff]
    %v140 = vld [vmem:[#allocation2 + $0x370] sm:$0xff]
    %v141 = vld [vmem:[#allocation2 + $0x378] sm:$0xff]
    %v142 = vld [vmem:[#allocation2 + $0x380] sm:$0xff]
    %v143 = vld [vmem:[#allocation2 + $0x388] sm:$0xff]
    %v144 = vld [vmem:[#allocation2 + $0x390] sm:$0xff]
    %v145 = vld [vmem:[#allocation2 + $0x398] sm:$0xff]
    %v146 = vld [vmem:[#allocation2 + $0x3a0] sm:$0xff]
    %v147 = vld [vmem:[#allocation2 + $0x3a8] sm:$0xff]
    %v148 = vld [vmem:[#allocation2 + $0x3b0] sm:$0xff]
    %v149 = vld [vmem:[#allocation2 + $0x3b8] sm:$0xff]
    %v150 = vld [vmem:[#allocation2 + $0x3c0] sm:$0xff]
    %v151 = vld [vmem:[#allocation2 + $0x3c8] sm:$0xff]
    %v152 = vld [vmem:[#allocation2 + $0x3d0] sm:$0xff]
    %v153 = vld [vmem:[#allocation2 + $0x3d8] sm:$0xff]
    %v154 = vld [vmem:[#allocation2 + $0x3e0] sm:$0xff]
    %v155 = vld [vmem:[#allocation2 + $0x3e8] sm:$0xff]
    %v156 = vld [vmem:[#allocation2 + $0x3f0] sm:$0xff]
    %v157 = vld [vmem:[#allocation2 + $0x3f8] sm:$0xff]
    %v158 = vld [vmem:[%s2] sm:$0x1]
    %v159 = vlaneseq
    %v160 = vshrl.u32 %v159, 7
    %v161 = vsub.s32 0, %v160
    %v162 = vrot.slane %v158, %v161
    %v165 = vcombine.high %v28, %v28
    %v167 = vunpack.c.l.s4 1983009808
    %v168 = vunpack.c.0.s8 %v167
    %v169 = vlaneseq
    %v170 = vshrl.u32 %v169, 7
    %v171 = vsub.s32 %v168, %v170
    %v172 = vrot.slane %v28, %v171
    %v174 = vunpack.c.l.s4 1983009808
    %v175 = vunpack.c.0.s8 %v174
    %v176 = vlaneseq
    %v177 = vshrl.u32 %v176, 7
    %v178 = vsub.s32 %v175, %v177
    %v179 = vrot.slane %v165, %v178
    %v180 = vcombine.high %v172, %v172
    %v181 = vcombine.high %v179, %v179
    %v182 = vcombine.high %v29, %v29
    %v184 = vunpack.c.l.s4 1983009808
    %v185 = vunpack.c.0.s8 %v184
    %v186 = vlaneseq
    %v187 = vshrl.u32 %v186, 7
    %v188 = vsub.s32 %v185, %v187
    %v189 = vrot.slane %v29, %v188
    %v191 = vunpack.c.l.s4 1983009808
    %v192 = vunpack.c.0.s8 %v191
    %v193 = vlaneseq
    %v194 = vshrl.u32 %v193, 7
    %v195 = vsub.s32 %v192, %v194
    %v196 = vrot.slane %v182, %v195
    %v197 = vcombine.high %v189, %v189
    %v198 = vcombine.high %v196, %v196
    %207 = vmatprep.subr.mxu0 0.0
    %208 = vmatpush1.msra.mxu0 %v45
    %209 = vmatprep.subr.mxu0 0.0
    %210 = vmatpush1.msra.mxu0 %v44
    %211 = vmatprep.subr.mxu0 0.0
    %212 = vmatpush1.msra.mxu0 %v43
    %213 = vmatprep.subr.mxu0 0.0
    %214 = vmatpush1.msra.mxu0 %v42
    %215 = vmatprep.subr.mxu0 0.0
    %216 = vmatpush1.msra.mxu0 %v41
    %217 = vmatprep.subr.mxu0 0.0
    %218 = vmatpush1.msra.mxu0 %v40
    %219 = vmatprep.subr.mxu0 0.0
    %220 = vmatpush1.msra.mxu0 %v39
    %221 = vmatprep.subr.mxu0 0.0
    %222 = vmatpush1.msra.mxu0 %v38
    %223 = vmatprep.subr.mxu0 0.0
    %224 = vmatpush1.msra.mxu0 %v37
    %225 = vmatprep.subr.mxu0 0.0
    %226 = vmatpush1.msra.mxu0 %v36
    %227 = vmatprep.subr.mxu0 0.0
    %228 = vmatpush1.msra.mxu0 %v35
    %229 = vmatprep.subr.mxu0 0.0
    %230 = vmatpush1.msra.mxu0 %v34
    %231 = vmatprep.subr.mxu0 0.0
    %232 = vmatpush1.msra.mxu0 %v33
    %233 = vmatprep.subr.mxu0 0.0
    %234 = vmatpush1.msra.mxu0 %v32
    %235 = vmatprep.subr.mxu0 0.0
    %236 = vmatpush1.msra.mxu0 %v31
    %237 = vmatprep.subr.mxu0 0.0
    %238 = vmatpush1.msra.mxu0 %v30
    %239 = vmatprep.subr.mxu0 0.0
    %240 = vmatpush2.msra.mxu0 %v61
    %241 = vmatprep.subr.mxu0 0.0
    %242 = vmatpush2.msra.mxu0 %v60
    %243 = vmatprep.subr.mxu0 0.0
    %244 = vmatpush2.msra.mxu0 %v59
    %245 = vmatprep.subr.mxu0 0.0
    %246 = vmatpush2.msra.mxu0 %v58
    %247 = vmatprep.subr.mxu0 0.0
    %248 = vmatpush2.msra.mxu0 %v57
    %249 = vmatprep.subr.mxu0 0.0
    %250 = vmatpush2.msra.mxu0 %v56
    %251 = vmatprep.subr.mxu0 0.0
    %252 = vmatpush2.msra.mxu0 %v55
    %253 = vmatprep.subr.mxu0 0.0
    %254 = vmatpush2.msra.mxu0 %v54
    %255 = vmatprep.subr.mxu0 0.0
    %256 = vmatpush2.msra.mxu0 %v53
    %257 = vmatprep.subr.mxu0 0.0
    %258 = vmatpush2.msra.mxu0 %v52
    %259 = vmatprep.subr.mxu0 0.0
    %260 = vmatpush2.msra.mxu0 %v51
    %261 = vmatprep.subr.mxu0 0.0
    %262 = vmatpush2.msra.mxu0 %v50
    %263 = vmatprep.subr.mxu0 0.0
    %264 = vmatpush2.msra.mxu0 %v49
    %265 = vmatprep.subr.mxu0 0.0
    %266 = vmatpush2.msra.mxu0 %v48
    %267 = vmatprep.subr.mxu0 0.0
    %268 = vmatpush2.msra.mxu0 %v47
    %269 = vmatprep.subr.mxu0 0.0
    %270 = vmatpush2.msra.mxu0 %v46
    %271 = vmatprep.mubr.f32.mxu0 %v180
    %272 = vmatmul.mubr.f32.gmra.mxu0 %v172
    %v273 = vpop.f32.mrf.mxu0
    %v274 = vadd.f32 %v162, %v273
    %v275 = vpop.f32.mrf.mxu0
    %276 = vdwg.mxu0
    %277 = vmatprep.subr.mxu0 0.0
    %278 = vmatpush1.msra.mxu0 %v77
    %279 = vmatprep.subr.mxu0 0.0
    %280 = vmatpush1.msra.mxu0 %v76
    %281 = vmatprep.subr.mxu0 0.0
    %282 = vmatpush1.msra.mxu0 %v75
    %283 = vmatprep.subr.mxu0 0.0
    %284 = vmatpush1.msra.mxu0 %v74
    %285 = vmatprep.subr.mxu0 0.0
    %286 = vmatpush1.msra.mxu0 %v73
    %287 = vmatprep.subr.mxu0 0.0
    %288 = vmatpush1.msra.mxu0 %v72
    %289 = vmatprep.subr.mxu0 0.0
    %290 = vmatpush1.msra.mxu0 %v71
    %291 = vmatprep.subr.mxu0 0.0
    %292 = vmatpush1.msra.mxu0 %v70
    %293 = vmatprep.subr.mxu0 0.0
    %294 = vmatpush1.msra.mxu0 %v69
    %295 = vmatprep.subr.mxu0 0.0
    %296 = vmatpush1.msra.mxu0 %v68
    %297 = vmatprep.subr.mxu0 0.0
    %298 = vmatpush1.msra.mxu0 %v67
    %299 = vmatprep.subr.mxu0 0.0
    %300 = vmatpush1.msra.mxu0 %v66
    %301 = vmatprep.subr.mxu0 0.0
    %302 = vmatpush1.msra.mxu0 %v65
    %303 = vmatprep.subr.mxu0 0.0
    %304 = vmatpush1.msra.mxu0 %v64
    %305 = vmatprep.subr.mxu0 0.0
    %306 = vmatpush1.msra.mxu0 %v63
    %307 = vmatprep.subr.mxu0 0.0
    %308 = vmatpush1.msra.mxu0 %v62
    %309 = vmatprep.subr.mxu0 0.0
    %310 = vmatpush2.msra.mxu0 %v93
    %311 = vmatprep.subr.mxu0 0.0
    %312 = vmatpush2.msra.mxu0 %v92
    %313 = vmatprep.subr.mxu0 0.0
    %314 = vmatpush2.msra.mxu0 %v91
    %315 = vmatprep.subr.mxu0 0.0
    %316 = vmatpush2.msra.mxu0 %v90
    %317 = vmatprep.subr.mxu0 0.0
    %318 = vmatpush2.msra.mxu0 %v89
    %319 = vmatprep.subr.mxu0 0.0
    %320 = vmatpush2.msra.mxu0 %v88
    %321 = vmatprep.subr.mxu0 0.0
    %322 = vmatpush2.msra.mxu0 %v87
    %323 = vmatprep.subr.mxu0 0.0
    %324 = vmatpush2.msra.mxu0 %v86
    %325 = vmatprep.subr.mxu0 0.0
    %326 = vmatpush2.msra.mxu0 %v85
    %327 = vmatprep.subr.mxu0 0.0
    %328 = vmatpush2.msra.mxu0 %v84
    %329 = vmatprep.subr.mxu0 0.0
    %330 = vmatpush2.msra.mxu0 %v83
    %331 = vmatprep.subr.mxu0 0.0
    %332 = vmatpush2.msra.mxu0 %v82
    %333 = vmatprep.subr.mxu0 0.0
    %334 = vmatpush2.msra.mxu0 %v81
    %335 = vmatprep.subr.mxu0 0.0
    %336 = vmatpush2.msra.mxu0 %v80
    %337 = vmatprep.subr.mxu0 0.0
    %338 = vmatpush2.msra.mxu0 %v79
    %339 = vmatprep.subr.mxu0 0.0
    %340 = vmatpush2.msra.mxu0 %v78
    %341 = vmatprep.mubr.f32.mxu0 %v181
    %342 = vmatmul.mubr.f32.gmra.mxu0 %v179
    %v343 = vpop.f32.mrf.mxu0
    %v344 = vadd.f32 %v274, %v343
    %v345 = vpop.f32.mrf.mxu0
    %346 = vdwg.mxu0
    %347 = vmatprep.subr.mxu0 0.0
    %348 = vmatpush1.msra.mxu0 %v109
    %349 = vmatprep.subr.mxu0 0.0
    %350 = vmatpush1.msra.mxu0 %v108
    %351 = vmatprep.subr.mxu0 0.0
    %352 = vmatpush1.msra.mxu0 %v107
    %353 = vmatprep.subr.mxu0 0.0
    %354 = vmatpush1.msra.mxu0 %v106
    %355 = vmatprep.subr.mxu0 0.0
    %356 = vmatpush1.msra.mxu0 %v105
    %357 = vmatprep.subr.mxu0 0.0
    %358 = vmatpush1.msra.mxu0 %v104
    %359 = vmatprep.subr.mxu0 0.0
    %360 = vmatpush1.msra.mxu0 %v103
    %361 = vmatprep.subr.mxu0 0.0
    %362 = vmatpush1.msra.mxu0 %v102
    %363 = vmatprep.subr.mxu0 0.0
    %364 = vmatpush1.msra.mxu0 %v101
    %365 = vmatprep.subr.mxu0 0.0
    %366 = vmatpush1.msra.mxu0 %v100
    %367 = vmatprep.subr.mxu0 0.0
    %368 = vmatpush1.msra.mxu0 %v99
    %369 = vmatprep.subr.mxu0 0.0
    %370 = vmatpush1.msra.mxu0 %v98
    %371 = vmatprep.subr.mxu0 0.0
    %372 = vmatpush1.msra.mxu0 %v97
    %373 = vmatprep.subr.mxu0 0.0
    %374 = vmatpush1.msra.mxu0 %v96
    %375 = vmatprep.subr.mxu0 0.0
    %376 = vmatpush1.msra.mxu0 %v95
    %377 = vmatprep.subr.mxu0 0.0
    %378 = vmatpush1.msra.mxu0 %v94
    %379 = vmatprep.subr.mxu0 0.0
    %380 = vmatpush2.msra.mxu0 %v125
    %381 = vmatprep.subr.mxu0 0.0
    %382 = vmatpush2.msra.mxu0 %v124
    %383 = vmatprep.subr.mxu0 0.0
    %384 = vmatpush2.msra.mxu0 %v123
    %385 = vmatprep.subr.mxu0 0.0
    %386 = vmatpush2.msra.mxu0 %v122
    %387 = vmatprep.subr.mxu0 0.0
    %388 = vmatpush2.msra.mxu0 %v121
    %389 = vmatprep.subr.mxu0 0.0
    %390 = vmatpush2.msra.mxu0 %v120
    %391 = vmatprep.subr.mxu0 0.0
    %392 = vmatpush2.msra.mxu0 %v119
    %393 = vmatprep.subr.mxu0 0.0
    %394 = vmatpush2.msra.mxu0 %v118
    %395 = vmatprep.subr.mxu0 0.0
    %396 = vmatpush2.msra.mxu0 %v117
    %397 = vmatprep.subr.mxu0 0.0
    %398 = vmatpush2.msra.mxu0 %v116
    %399 = vmatprep.subr.mxu0 0.0
    %400 = vmatpush2.msra.mxu0 %v115
    %401 = vmatprep.subr.mxu0 0.0
    %402 = vmatpush2.msra.mxu0 %v114
    %403 = vmatprep.subr.mxu0 0.0
    %404 = vmatpush2.msra.mxu0 %v113
    %405 = vmatprep.subr.mxu0 0.0
    %406 = vmatpush2.msra.mxu0 %v112
    %407 = vmatprep.subr.mxu0 0.0
    %408 = vmatpush2.msra.mxu0 %v111
    %409 = vmatprep.subr.mxu0 0.0
    %410 = vmatpush2.msra.mxu0 %v110
    %411 = vmatprep.mubr.f32.mxu0 %v197
    %412 = vmatmul.mubr.f32.gmra.mxu0 %v189
    %v413 = vpop.f32.mrf.mxu0
    %v414 = vadd.f32 %v344, %v413
    %v415 = vpop.f32.mrf.mxu0
    %416 = vdwg.mxu0
    %417 = vmatprep.subr.mxu0 0.0
    %418 = vmatpush1.msra.mxu0 %v141
    %419 = vmatprep.subr.mxu0 0.0
    %420 = vmatpush1.msra.mxu0 %v140
    %421 = vmatprep.subr.mxu0 0.0
    %422 = vmatpush1.msra.mxu0 %v139
    %423 = vmatprep.subr.mxu0 0.0
    %424 = vmatpush1.msra.mxu0 %v138
    %425 = vmatprep.subr.mxu0 0.0
    %426 = vmatpush1.msra.mxu0 %v137
    %427 = vmatprep.subr.mxu0 0.0
    %428 = vmatpush1.msra.mxu0 %v136
    %429 = vmatprep.subr.mxu0 0.0
    %430 = vmatpush1.msra.mxu0 %v135
    %431 = vmatprep.subr.mxu0 0.0
    %432 = vmatpush1.msra.mxu0 %v134
    %433 = vmatprep.subr.mxu0 0.0
    %434 = vmatpush1.msra.mxu0 %v133
    %435 = vmatprep.subr.mxu0 0.0
    %436 = vmatpush1.msra.mxu0 %v132
    %437 = vmatprep.subr.mxu0 0.0
    %438 = vmatpush1.msra.mxu0 %v131
    %439 = vmatprep.subr.mxu0 0.0
    %440 = vmatpush1.msra.mxu0 %v130
    %441 = vmatprep.subr.mxu0 0.0
    %442 = vmatpush1.msra.mxu0 %v129
    %443 = vmatprep.subr.mxu0 0.0
    %444 = vmatpush1.msra.mxu0 %v128
    %445 = vmatprep.subr.mxu0 0.0
    %446 = vmatpush1.msra.mxu0 %v127
    %447 = vmatprep.subr.mxu0 0.0
    %448 = vmatpush1.msra.mxu0 %v126
    %449 = vmatprep.subr.mxu0 0.0
    %450 = vmatpush2.msra.mxu0 %v157
    %451 = vmatprep.subr.mxu0 0.0
    %452 = vmatpush2.msra.mxu0 %v156
    %453 = vmatprep.subr.mxu0 0.0
    %454 = vmatpush2.msra.mxu0 %v155
    %455 = vmatprep.subr.mxu0 0.0
    %456 = vmatpush2.msra.mxu0 %v154
    %457 = vmatprep.subr.mxu0 0.0
    %458 = vmatpush2.msra.mxu0 %v153
    %459 = vmatprep.subr.mxu0 0.0
    %460 = vmatpush2.msra.mxu0 %v152
    %461 = vmatprep.subr.mxu0 0.0
    %462 = vmatpush2.msra.mxu0 %v151
    %463 = vmatprep.subr.mxu0 0.0
    %464 = vmatpush2.msra.mxu0 %v150
    %465 = vmatprep.subr.mxu0 0.0
    %466 = vmatpush2.msra.mxu0 %v149
    %467 = vmatprep.subr.mxu0 0.0
    %468 = vmatpush2.msra.mxu0 %v148
    %469 = vmatprep.subr.mxu0 0.0
    %470 = vmatpush2.msra.mxu0 %v147
    %471 = vmatprep.subr.mxu0 0.0
    %472 = vmatpush2.msra.mxu0 %v146
    %473 = vmatprep.subr.mxu0 0.0
    %474 = vmatpush2.msra.mxu0 %v145
    %475 = vmatprep.subr.mxu0 0.0
    %476 = vmatpush2.msra.mxu0 %v144
    %477 = vmatprep.subr.mxu0 0.0
    %478 = vmatpush2.msra.mxu0 %v143
    %479 = vmatprep.subr.mxu0 0.0
    %480 = vmatpush2.msra.mxu0 %v142
    %481 = vmatprep.mubr.f32.mxu0 %v198
    %482 = vmatmul.mubr.f32.gmra.mxu0 %v196
    %v483 = vpop.f32.mrf.mxu0
    %v484 = vadd.f32 %v414, %v483
    %v485 = vpop.f32.mrf.mxu0
    %486 = vdwg.mxu0
    %v487 = vmax.f32 %v484, 0.0
    %v488 = vld [vmem:[#allocation2 + $0x400] sm:$0xff]
    %v489 = vld [vmem:[#allocation2 + $0x408] sm:$0xff]
    %v490 = vld [vmem:[#allocation2 + $0x410] sm:$0xff]
    %v491 = vld [vmem:[#allocation2 + $0x418] sm:$0xff]
    %v492 = vld [vmem:[#allocation2 + $0x420] sm:$0xff]
    %v493 = vld [vmem:[#allocation2 + $0x428] sm:$0xff]
    %v494 = vld [vmem:[#allocation2 + $0x430] sm:$0xff]
    %v495 = vld [vmem:[#allocation2 + $0x438] sm:$0xff]
    %v496 = vld [vmem:[#allocation2 + $0x440] sm:$0xff]
    %v497 = vld [vmem:[#allocation2 + $0x448] sm:$0xff]
    %v498 = vld [vmem:[#allocation2 + $0x450] sm:$0xff]
    %v499 = vld [vmem:[#allocation2 + $0x458] sm:$0xff]
    %v500 = vld [vmem:[#allocation2 + $0x460] sm:$0xff]
    %v501 = vld [vmem:[#allocation2 + $0x468] sm:$0xff]
    %v502 = vld [vmem:[#allocation2 + $0x470] sm:$0xff]
    %v503 = vld [vmem:[#allocation2 + $0x478] sm:$0xff]
    %v504 = vld [vmem:[%s2 + $0x1] sm:$0x1]
    %v505 = vlaneseq
    %v506 = vshrl.u32 %v505, 7
    %v507 = vsub.s32 0, %v506
    %v508 = vrot.slane %v504, %v507
    %509 = vmatprep.subr.mxu0 0.0
    %510 = vmatpush1.msra.mxu0 %v503
    %511 = vmatprep.subr.mxu0 0.0
    %512 = vmatpush1.msra.mxu0 %v502
    %513 = vmatprep.subr.mxu0 0.0
    %514 = vmatpush1.msra.mxu0 %v501
    %515 = vmatprep.subr.mxu0 0.0
    %516 = vmatpush1.msra.mxu0 %v500
    %517 = vmatprep.subr.mxu0 0.0
    %518 = vmatpush1.msra.mxu0 %v499
    %519 = vmatprep.subr.mxu0 0.0
    %520 = vmatpush1.msra.mxu0 %v498
    %521 = vmatprep.subr.mxu0 0.0
    %522 = vmatpush1.msra.mxu0 %v497
    %523 = vmatprep.subr.mxu0 0.0
    %524 = vmatpush1.msra.mxu0 %v496
    %525 = vmatprep.subr.mxu0 0.0
    %526 = vmatpush1.msra.mxu0 %v495
    %527 = vmatprep.subr.mxu0 0.0
    %528 = vmatpush1.msra.mxu0 %v494
    %529 = vmatprep.subr.mxu0 0.0
    %530 = vmatpush1.msra.mxu0 %v493
    %531 = vmatprep.subr.mxu0 0.0
    %532 = vmatpush1.msra.mxu0 %v492
    %533 = vmatprep.subr.mxu0 0.0
    %534 = vmatpush1.msra.mxu0 %v491
    %535 = vmatprep.subr.mxu0 0.0
    %536 = vmatpush1.msra.mxu0 %v490
    %537 = vmatprep.subr.mxu0 0.0
    %538 = vmatpush1.msra.mxu0 %v489
    %539 = vmatprep.subr.mxu0 0.0
    %540 = vmatpush1.msra.mxu0 %v488
    %541 = vmatprep.subr.mxu0 0.0
    %542 = vmatpush2.msra.mxu0 0.0
    %543 = vmatprep.subr.mxu0 0.0
    %544 = vmatpush2.msra.mxu0 0.0
    %545 = vmatprep.subr.mxu0 0.0
    %546 = vmatpush2.msra.mxu0 0.0
    %547 = vmatprep.subr.mxu0 0.0
    %548 = vmatpush2.msra.mxu0 0.0
    %549 = vmatprep.subr.mxu0 0.0
    %550 = vmatpush2.msra.mxu0 0.0
    %551 = vmatprep.subr.mxu0 0.0
    %552 = vmatpush2.msra.mxu0 0.0
    %553 = vmatprep.subr.mxu0 0.0
    %554 = vmatpush2.msra.mxu0 0.0
    %555 = vmatprep.subr.mxu0 0.0
    %556 = vmatpush2.msra.mxu0 0.0
    %557 = vmatprep.subr.mxu0 0.0
    %558 = vmatpush2.msra.mxu0 0.0
    %559 = vmatprep.subr.mxu0 0.0
    %560 = vmatpush2.msra.mxu0 0.0
    %561 = vmatprep.subr.mxu0 0.0
    %562 = vmatpush2.msra.mxu0 0.0
    %563 = vmatprep.subr.mxu0 0.0
    %564 = vmatpush2.msra.mxu0 0.0
    %565 = vmatprep.subr.mxu0 0.0
    %566 = vmatpush2.msra.mxu0 0.0
    %567 = vmatprep.subr.mxu0 0.0
    %568 = vmatpush2.msra.mxu0 0.0
    %569 = vmatprep.subr.mxu0 0.0
    %570 = vmatpush2.msra.mxu0 0.0
    %571 = vmatprep.subr.mxu0 0.0
    %572 = vmatpush2.msra.mxu0 0.0
    %573 = vmatprep.mubr.f32.mxu0 0.0
    %574 = vmatmul.mubr.f32.gmra.mxu0 %v487
    %v575 = vpop.f32.mrf.mxu0
    %v576 = vadd.f32 %v508, %v575
    %v577 = vpop.f32.mrf.mxu0
    %578 = vdwg.mxu0
    %v579 = vmax.f32 %v576, 0.0
    %v580 = vld [vmem:[#allocation2 + $0x480] sm:$0xff]
    %v581 = vld [vmem:[#allocation2 + $0x488] sm:$0xff]
    %v582 = vld [vmem:[#allocation2 + $0x490] sm:$0xff]
    %v583 = vld [vmem:[#allocation2 + $0x498] sm:$0xff]
    %v584 = vld [vmem:[#allocation2 + $0x4a0] sm:$0xff]
    %v585 = vld [vmem:[#allocation2 + $0x4a8] sm:$0xff]
    %v586 = vld [vmem:[#allocation2 + $0x4b0] sm:$0xff]
    %v587 = vld [vmem:[#allocation2 + $0x4b8] sm:$0xff]
    %v588 = vld [vmem:[#allocation2 + $0x4c0] sm:$0xff]
    %v589 = vld [vmem:[#allocation2 + $0x4c8] sm:$0xff]
    %v590 = vld [vmem:[#allocation2 + $0x4d0] sm:$0xff]
    %v591 = vld [vmem:[#allocation2 + $0x4d8] sm:$0xff]
    %v592 = vld [vmem:[#allocation2 + $0x4e0] sm:$0xff]
    %v593 = vld [vmem:[#allocation2 + $0x4e8] sm:$0xff]
    %v594 = vld [vmem:[#allocation2 + $0x4f0] sm:$0xff]
    %v595 = vld [vmem:[#allocation2 + $0x4f8] sm:$0xff]
    %v596 = vld [vmem:[%s2 + $0x2] sm:$0x1]
    %v597 = vlaneseq
    %v598 = vshrl.u32 %v597, 7
    %v599 = vsub.s32 0, %v598
    %v600 = vrot.slane %v596, %v599
    %601 = vmatprep.subr.mxu0 0.0
    %602 = vmatpush1.msra.mxu0 %v595
    %603 = vmatprep.subr.mxu0 0.0
    %604 = vmatpush1.msra.mxu0 %v594
    %605 = vmatprep.subr.mxu0 0.0
    %606 = vmatpush1.msra.mxu0 %v593
    %607 = vmatprep.subr.mxu0 0.0
    %608 = vmatpush1.msra.mxu0 %v592
    %609 = vmatprep.subr.mxu0 0.0
    %610 = vmatpush1.msra.mxu0 %v591
    %611 = vmatprep.subr.mxu0 0.0
    %612 = vmatpush1.msra.mxu0 %v590
    %613 = vmatprep.subr.mxu0 0.0
    %614 = vmatpush1.msra.mxu0 %v589
    %615 = vmatprep.subr.mxu0 0.0
    %616 = vmatpush1.msra.mxu0 %v588
    %617 = vmatprep.subr.mxu0 0.0
    %618 = vmatpush1.msra.mxu0 %v587
    %619 = vmatprep.subr.mxu0 0.0
    %620 = vmatpush1.msra.mxu0 %v586
    %621 = vmatprep.subr.mxu0 0.0
    %622 = vmatpush1.msra.mxu0 %v585
    %623 = vmatprep.subr.mxu0 0.0
    %624 = vmatpush1.msra.mxu0 %v584
    %625 = vmatprep.subr.mxu0 0.0
    %626 = vmatpush1.msra.mxu0 %v583
    %627 = vmatprep.subr.mxu0 0.0
    %628 = vmatpush1.msra.mxu0 %v582
    %629 = vmatprep.subr.mxu0 0.0
    %630 = vmatpush1.msra.mxu0 %v581
    %631 = vmatprep.subr.mxu0 0.0
    %632 = vmatpush1.msra.mxu0 %v580
    %633 = vmatprep.subr.mxu0 0.0
    %634 = vmatpush2.msra.mxu0 0.0
    %635 = vmatprep.subr.mxu0 0.0
    %636 = vmatpush2.msra.mxu0 0.0
    %637 = vmatprep.subr.mxu0 0.0
    %638 = vmatpush2.msra.mxu0 0.0
    %639 = vmatprep.subr.mxu0 0.0
    %640 = vmatpush2.msra.mxu0 0.0
    %641 = vmatprep.subr.mxu0 0.0
    %642 = vmatpush2.msra.mxu0 0.0
    %643 = vmatprep.subr.mxu0 0.0
    %644 = vmatpush2.msra.mxu0 0.0
    %645 = vmatprep.subr.mxu0 0.0
    %646 = vmatpush2.msra.mxu0 0.0
    %647 = vmatprep.subr.mxu0 0.0
    %648 = vmatpush2.msra.mxu0 0.0
    %649 = vmatprep.subr.mxu0 0.0
    %650 = vmatpush2.msra.mxu0 0.0
    %651 = vmatprep.subr.mxu0 0.0
    %652 = vmatpush2.msra.mxu0 0.0
    %653 = vmatprep.subr.mxu0 0.0
    %654 = vmatpush2.msra.mxu0 0.0
    %655 = vmatprep.subr.mxu0 0.0
    %656 = vmatpush2.msra.mxu0 0.0
    %657 = vmatprep.subr.mxu0 0.0
    %658 = vmatpush2.msra.mxu0 0.0
    %659 = vmatprep.subr.mxu0 0.0
    %660 = vmatpush2.msra.mxu0 0.0
    %661 = vmatprep.subr.mxu0 0.0
    %662 = vmatpush2.msra.mxu0 0.0
    %663 = vmatprep.subr.mxu0 0.0
    %664 = vmatpush2.msra.mxu0 0.0
    %665 = vmatprep.mubr.f32.mxu0 0.0
    %666 = vmatmul.mubr.f32.gmra.mxu0 %v579
    %v667 = vpop.f32.mrf.mxu0
    %v668 = vadd.f32 %v600, %v667
    %v669 = vpop.f32.mrf.mxu0
    %670 = vdwg.mxu0
    %v671 = vmax.f32 %v668, 0.0
    %v672 = vld [vmem:[#allocation2 + $0x500] sm:$0xff]
    %v673 = vld [vmem:[#allocation2 + $0x508] sm:$0xff]
    %v674 = vld [vmem:[#allocation2 + $0x510] sm:$0xff]
    %v675 = vld [vmem:[#allocation2 + $0x518] sm:$0xff]
    %v676 = vld [vmem:[#allocation2 + $0x520] sm:$0xff]
    %v677 = vld [vmem:[#allocation2 + $0x528] sm:$0xff]
    %v678 = vld [vmem:[#allocation2 + $0x530] sm:$0xff]
    %v679 = vld [vmem:[#allocation2 + $0x538] sm:$0xff]
    %v680 = vld [vmem:[#allocation2 + $0x540] sm:$0xff]
    %v681 = vld [vmem:[#allocation2 + $0x548] sm:$0xff]
    %v682 = vld [vmem:[#allocation2 + $0x550] sm:$0xff]
    %v683 = vld [vmem:[#allocation2 + $0x558] sm:$0xff]
    %v684 = vld [vmem:[#allocation2 + $0x560] sm:$0xff]
    %v685 = vld [vmem:[#allocation2 + $0x568] sm:$0xff]
    %v686 = vld [vmem:[#allocation2 + $0x570] sm:$0xff]
    %v687 = vld [vmem:[#allocation2 + $0x578] sm:$0xff]
    %v688 = vld [vmem:[%s2 + $0x3] sm:$0x1]
    %v689 = vlaneseq
    %v690 = vshrl.u32 %v689, 7
    %v691 = vsub.s32 0, %v690
    %v692 = vrot.slane %v688, %v691
    %693 = vmatprep.subr.mxu0 0.0
    %694 = vmatpush1.msra.mxu0 %v687
    %695 = vmatprep.subr.mxu0 0.0
    %696 = vmatpush1.msra.mxu0 %v686
    %697 = vmatprep.subr.mxu0 0.0
    %698 = vmatpush1.msra.mxu0 %v685
    %699 = vmatprep.subr.mxu0 0.0
    %700 = vmatpush1.msra.mxu0 %v684
    %701 = vmatprep.subr.mxu0 0.0
    %702 = vmatpush1.msra.mxu0 %v683
    %703 = vmatprep.subr.mxu0 0.0
    %704 = vmatpush1.msra.mxu0 %v682
    %705 = vmatprep.subr.mxu0 0.0
    %706 = vmatpush1.msra.mxu0 %v681
    %707 = vmatprep.subr.mxu0 0.0
    %708 = vmatpush1.msra.mxu0 %v680
    %709 = vmatprep.subr.mxu0 0.0
    %710 = vmatpush1.msra.mxu0 %v679
    %711 = vmatprep.subr.mxu0 0.0
    %712 = vmatpush1.msra.mxu0 %v678
    %713 = vmatprep.subr.mxu0 0.0
    %714 = vmatpush1.msra.mxu0 %v677
    %715 = vmatprep.subr.mxu0 0.0
    %716 = vmatpush1.msra.mxu0 %v676
    %717 = vmatprep.subr.mxu0 0.0
    %718 = vmatpush1.msra.mxu0 %v675
    %719 = vmatprep.subr.mxu0 0.0
    %720 = vmatpush1.msra.mxu0 %v674
    %721 = vmatprep.subr.mxu0 0.0
    %722 = vmatpush1.msra.mxu0 %v673
    %723 = vmatprep.subr.mxu0 0.0
    %724 = vmatpush1.msra.mxu0 %v672
    %725 = vmatprep.subr.mxu0 0.0
    %726 = vmatpush2.msra.mxu0 0.0
    %727 = vmatprep.subr.mxu0 0.0
    %728 = vmatpush2.msra.mxu0 0.0
    %729 = vmatprep.subr.mxu0 0.0
    %730 = vmatpush2.msra.mxu0 0.0
    %731 = vmatprep.subr.mxu0 0.0
    %732 = vmatpush2.msra.mxu0 0.0
    %733 = vmatprep.subr.mxu0 0.0
    %734 = vmatpush2.msra.mxu0 0.0
    %735 = vmatprep.subr.mxu0 0.0
    %736 = vmatpush2.msra.mxu0 0.0
    %737 = vmatprep.subr.mxu0 0.0
    %738 = vmatpush2.msra.mxu0 0.0
    %739 = vmatprep.subr.mxu0 0.0
    %740 = vmatpush2.msra.mxu0 0.0
    %741 = vmatprep.subr.mxu0 0.0
    %742 = vmatpush2.msra.mxu0 0.0
    %743 = vmatprep.subr.mxu0 0.0
    %744 = vmatpush2.msra.mxu0 0.0
    %745 = vmatprep.subr.mxu0 0.0
    %746 = vmatpush2.msra.mxu0 0.0
    %747 = vmatprep.subr.mxu0 0.0
    %748 = vmatpush2.msra.mxu0 0.0
    %749 = vmatprep.subr.mxu0 0.0
    %750 = vmatpush2.msra.mxu0 0.0
    %751 = vmatprep.subr.mxu0 0.0
    %752 = vmatpush2.msra.mxu0 0.0
    %753 = vmatprep.subr.mxu0 0.0
    %754 = vmatpush2.msra.mxu0 0.0
    %755 = vmatprep.subr.mxu0 0.0
    %756 = vmatpush2.msra.mxu0 0.0
    %757 = vmatprep.mubr.f32.mxu0 0.0
    %758 = vmatmul.mubr.f32.gmra.mxu0 %v671
    %v759 = vpop.f32.mrf.mxu0
    %v760 = vadd.f32 %v692, %v759
    %v761 = vpop.f32.mrf.mxu0
    %762 = vdwg.mxu0
    %v763 = vmax.f32 %v760, 0.0
    %v764 = vld [vmem:[#allocation2 + $0x580] sm:$0xff]
    %v765 = vld [vmem:[#allocation2 + $0x588] sm:$0xff]
    %v766 = vld [vmem:[#allocation2 + $0x590] sm:$0xff]
    %v767 = vld [vmem:[#allocation2 + $0x598] sm:$0xff]
    %v768 = vld [vmem:[#allocation2 + $0x5a0] sm:$0xff]
    %v769 = vld [vmem:[#allocation2 + $0x5a8] sm:$0xff]
    %v770 = vld [vmem:[#allocation2 + $0x5b0] sm:$0xff]
    %v771 = vld [vmem:[#allocation2 + $0x5b8] sm:$0xff]
    %v772 = vld [vmem:[#allocation2 + $0x5c0] sm:$0xff]
    %v773 = vld [vmem:[#allocation2 + $0x5c8] sm:$0xff]
    %v774 = vld [vmem:[#allocation2 + $0x5d0] sm:$0xff]
    %v775 = vld [vmem:[#allocation2 + $0x5d8] sm:$0xff]
    %v776 = vld [vmem:[#allocation2 + $0x5e0] sm:$0xff]
    %v777 = vld [vmem:[#allocation2 + $0x5e8] sm:$0xff]
    %v778 = vld [vmem:[#allocation2 + $0x5f0] sm:$0xff]
    %v779 = vld [vmem:[#allocation2 + $0x5f8] sm:$0xff]
    %v780 = vld [vmem:[%s2 + $0x4] sm:$0x1]
    %v781 = vlaneseq
    %v782 = vshrl.u32 %v781, 7
    %v783 = vsub.s32 0, %v782
    %v784 = vrot.slane %v780, %v783
    %785 = vmatprep.subr.mxu0 0.0
    %786 = vmatpush1.msra.mxu0 %v779
    %787 = vmatprep.subr.mxu0 0.0
    %788 = vmatpush1.msra.mxu0 %v778
    %789 = vmatprep.subr.mxu0 0.0
    %790 = vmatpush1.msra.mxu0 %v777
    %791 = vmatprep.subr.mxu0 0.0
    %792 = vmatpush1.msra.mxu0 %v776
    %793 = vmatprep.subr.mxu0 0.0
    %794 = vmatpush1.msra.mxu0 %v775
    %795 = vmatprep.subr.mxu0 0.0
    %796 = vmatpush1.msra.mxu0 %v774
    %797 = vmatprep.subr.mxu0 0.0
    %798 = vmatpush1.msra.mxu0 %v773
    %799 = vmatprep.subr.mxu0 0.0
    %800 = vmatpush1.msra.mxu0 %v772
    %801 = vmatprep.subr.mxu0 0.0
    %802 = vmatpush1.msra.mxu0 %v771
    %803 = vmatprep.subr.mxu0 0.0
    %804 = vmatpush1.msra.mxu0 %v770
    %805 = vmatprep.subr.mxu0 0.0
    %806 = vmatpush1.msra.mxu0 %v769
    %807 = vmatprep.subr.mxu0 0.0
    %808 = vmatpush1.msra.mxu0 %v768
    %809 = vmatprep.subr.mxu0 0.0
    %810 = vmatpush1.msra.mxu0 %v767
    %811 = vmatprep.subr.mxu0 0.0
    %812 = vmatpush1.msra.mxu0 %v766
    %813 = vmatprep.subr.mxu0 0.0
    %814 = vmatpush1.msra.mxu0 %v765
    %815 = vmatprep.subr.mxu0 0.0
    %816 = vmatpush1.msra.mxu0 %v764
    %817 = vmatprep.subr.mxu0 0.0
    %818 = vmatpush2.msra.mxu0 0.0
    %819 = vmatprep.subr.mxu0 0.0
    %820 = vmatpush2.msra.mxu0 0.0
    %821 = vmatprep.subr.mxu0 0.0
    %822 = vmatpush2.msra.mxu0 0.0
    %823 = vmatprep.subr.mxu0 0.0
    %824 = vmatpush2.msra.mxu0 0.0
    %825 = vmatprep.subr.mxu0 0.0
    %826 = vmatpush2.msra.mxu0 0.0
    %827 = vmatprep.subr.mxu0 0.0
    %828 = vmatpush2.msra.mxu0 0.0
    %829 = vmatprep.subr.mxu0 0.0
    %830 = vmatpush2.msra.mxu0 0.0
    %831 = vmatprep.subr.mxu0 0.0
    %832 = vmatpush2.msra.mxu0 0.0
    %833 = vmatprep.subr.mxu0 0.0
    %834 = vmatpush2.msra.mxu0 0.0
    %835 = vmatprep.subr.mxu0 0.0
    %836 = vmatpush2.msra.mxu0 0.0
    %837 = vmatprep.subr.mxu0 0.0
    %838 = vmatpush2.msra.mxu0 0.0
    %839 = vmatprep.subr.mxu0 0.0
    %840 = vmatpush2.msra.mxu0 0.0
    %841 = vmatprep.subr.mxu0 0.0
    %842 = vmatpush2.msra.mxu0 0.0
    %843 = vmatprep.subr.mxu0 0.0
    %844 = vmatpush2.msra.mxu0 0.0
    %845 = vmatprep.subr.mxu0 0.0
    %846 = vmatpush2.msra.mxu0 0.0
    %847 = vmatprep.subr.mxu0 0.0
    %848 = vmatpush2.msra.mxu0 0.0
    %849 = vmatprep.mubr.f32.mxu0 0.0
    %850 = vmatmul.mubr.f32.gmra.mxu0 %v763
    %v851 = vpop.f32.mrf.mxu0
    %v852 = vadd.f32 %v784, %v851
    %v853 = vpop.f32.mrf.mxu0
    %854 = vdwg.mxu0
    %855 = vst [vmem:[%s3] sm:$0x3] %v852
    // Predicated region
    $region18: #{cnn_base_forward.1} parent=1 // pred_check
      _
    $region19: #{cnn_base_forward.1} parent=1 // pred_check_branch
      %857 = sbr.rel (0) target = $region21
    $region20: #{cnn_base_forward.1} parent=1 // pred_region
      _
    $region21: #{cnn_base_forward.1} parent=1 // pred_fallthru
      _
    // Predicated region
    $region22: #{cnn_base_forward.1} parent=1 // pred_check
      _
    $region23: #{cnn_base_forward.1} parent=1 // pred_check_branch
      %859 = sbr.rel (0) target = $region25
    $region24: #{cnn_base_forward.1} parent=1 // pred_region
      _
    $region25: #{cnn_base_forward.1} parent=1 // pred_fallthru
      _
    %860 = vsyncpa [#allocation3], 1

</llo_original>
